<compile_context>
chip_gen: v5e
topology: v5e:2x2
jax: 0.10.0
libtpu: 0.0.40
codegen_flags: <defaults>
</compile_context>

<pallas_src>
import jax
import jax.numpy as jnp
import numpy as np
from jax.experimental import pallas as pl
from jax.experimental.pallas import tpu as pltpu


def _se_kernel(x_ref, w1t_ref, w2t_ref, o_ref):
    # x_ref: (Bt, C, HW) -- channels on sublanes, spatial on lanes.
    # w1t_ref: (C, C_red) = w1.T ; w2t_ref: (C_red, C) = w2.T
    x = x_ref[...]

    # AdaptiveAvgPool2d(1): mean over the spatial (lane) axis, accumulated in
    # f32 without materializing an f32 copy of the whole tile.
    pooled = jnp.mean(x, axis=-1, dtype=jnp.float32)                    # (Bt, C)

    # fc: Linear(C -> C_red, no bias) + ReLU, batched over the tile (MXU M = Bt).
    h = jnp.dot(pooled, w1t_ref[...], preferred_element_type=jnp.float32)
    h = jnp.maximum(h, 0.0)                                             # (Bt, C_red)

    # Linear(C_red -> C, no bias) + Sigmoid.
    gate = jax.nn.sigmoid(
        jnp.dot(h, w2t_ref[...], preferred_element_type=jnp.float32))   # (Bt, C)

    # Channel-wise rescale; broadcast (Bt, C, 1) along the spatial/lane axis.
    o_ref[...] = (x * gate[:, :, None].astype(x.dtype)).astype(o_ref.dtype)


def _chip_params():
    """(tile_target_bytes, vmem_cap_bytes, min_grid) derived from the chip."""
    try:
        vmem = pltpu.get_tpu_info().vmem_capacity_bytes
    except Exception:
        vmem = 64 << 20            # conservative fallback (v7x-sized VMEM)
    if vmem <= (64 << 20):         # v7x: 64 MiB VMEM, 2 TensorCores per chip
        return 6 << 20, 36 << 20, 4
    return 8 << 20, 64 << 20, 2    # v5e / v6e: 128 MiB VMEM, 1 TensorCore


def _choose_batch_tile(B, per_batch_bytes, target_bytes, min_grid):
    """Biggest batch tile under the byte target, keeping >= min_grid grid steps."""
    bt_cap = max(1, min(B, target_bytes // max(per_batch_bytes, 1)))
    if B >= min_grid:
        bt_cap = min(bt_cap, max(1, B // min_grid))
    return int(bt_cap)
    # TODO(synk): for B < min_grid on v7x one TensorCore idles; a second grid
    # axis over HW chunks (rescale-only) would recover it for tiny batches.


def sigmoid_attention_block(x, w1, w2):
    """x: (B, C, H, W); w1: (C//r, C); w2: (C, C//r). Matches the PyTorch forward."""
    B, C, H, W = x.shape
    HW = H * W
    c_red = w1.shape[0]

    x_r = x.reshape(B, C, HW)       # free: contiguous NCHW reshape, no transpose
    w1_t = jnp.transpose(w1)        # (C, C_red) -- tiny, done once
    w2_t = jnp.transpose(w2)        # (C_red, C)

    target_bytes, vmem_cap, min_grid = _chip_params()
    per_batch_bytes = HW * C * x.dtype.itemsize
    Bt = _choose_batch_tile(B, per_batch_bytes, target_bytes, min_grid)
    grid_b = pl.cdiv(B, Bt)         # ragged last tile: Pallas masks the writes

    tile_bytes = Bt * per_batch_bytes
    w_bytes = w1.size * w1.dtype.itemsize + w2.size * w2.dtype.itemsize
    # double-buffered input + double-buffered output + weights + slack
    vmem_needed = 4 * tile_bytes + 2 * w_bytes + (2 << 20)
    vmem_limit = int(min(max(vmem_needed, 16 << 20), vmem_cap))

    cost = pl.CostEstimate(
        flops=int(4 * B * C * c_red + 2 * B * C * HW),
        transcendentals=int(B * C),
        bytes_accessed=int(2 * B * C * HW * x.dtype.itemsize + w_bytes),
    )

    out_r = pl.pallas_call(
        _se_kernel,
        out_shape=jax.ShapeDtypeStruct((B, C, HW), x.dtype),
        grid_spec=pltpu.PrefetchScalarGridSpec(
            num_scalar_prefetch=0,
            grid=(grid_b,),
            in_specs=[
                pl.BlockSpec((Bt, C, HW), lambda b: (b, 0, 0)),
                pl.BlockSpec((C, c_red), lambda b: (0, 0)),
                pl.BlockSpec((c_red, C), lambda b: (0, 0)),
            ],
            out_specs=pl.BlockSpec((Bt, C, HW), lambda b: (b, 0, 0)),
        ),
        compiler_params=pltpu.CompilerParams(
            dimension_semantics=("parallel",),
            vmem_limit_bytes=vmem_limit),
        cost_estimate=cost,
    )(x_r, w1_t, w2_t)

    return out_r.reshape(B, C, H, W)


def _reference(x, w1, w2):
    # Pure-JAX reference mirroring the PyTorch forward.
    y = jnp.mean(x, axis=(2, 3))                 # (B, C)
    y = jnp.maximum(y @ w1.T, 0.0)               # (B, C//r)
    y = jax.nn.sigmoid(y @ w2.T)                 # (B, C)
    return x * y[:, :, None, None]


if __name__ == "__main__":
    # Small shapes consistent with the module: B=2, C=32 (reduction 16 -> 2), 16x16 spatial.
    B, C, H, W = 2, 32, 16, 16
    reduction_ratio = 16
    C_red = C // reduction_ratio

    key = jax.random.PRNGKey(0)
    kx, k1, k2 = jax.random.split(key, 3)
    x = jax.random.normal(kx, (B, C, H, W), dtype=jnp.float32)
    # nn.Linear weights: (out_features, in_features), bias=False.
    w1 = jax.random.normal(k1, (C_red, C), dtype=jnp.float32) * 0.1
    w2 = jax.random.normal(k2, (C, C_red), dtype=jnp.float32) * 0.1

    out = sigmoid_attention_block(x, w1, w2)
    out = jax.block_until_ready(out)

    ref = _reference(x, w1, w2)
    np.testing.assert_allclose(np.asarray(out), np.asarray(ref), rtol=1e-5, atol=1e-5)

    print("KERNEL_OK")
</pallas_src>

<mosaic_0001>
module attributes {stable_mosaic.version = 11 : i64} {
  func.func @_se_kernel(%arg0: i32, %arg1: memref<2x32x256xf32, #tpu.memory_space<vmem>>, %arg2: memref<32x2xf32, #tpu.memory_space<vmem>>, %arg3: memref<2x32xf32, #tpu.memory_space<vmem>>, %arg4: memref<2x32x256xf32, #tpu.memory_space<vmem>>) attributes {dimension_semantics = [#tpu.dimension_semantics<parallel>], iteration_bounds = array<i64: 1>, scalar_prefetch = 0 : i64, scratch_operands = 0 : i64, tpu.core_type = #tpu.core_type<tc>, window_params = [{transform_indices = @transform_0, window_bounds = array<i64: 2, 32, 256>}, {pipeline_mode = #tpu.pipeline_mode<synchronous>, transform_indices = @transform_1, window_bounds = array<i64: 32, 2>}, {pipeline_mode = #tpu.pipeline_mode<synchronous>, transform_indices = @transform_2, window_bounds = array<i64: 2, 32>}, {transform_indices = @transform_3, window_bounds = array<i64: 2, 32, 256>}]} {
    %c0 = arith.constant 0 : index
    %c0_0 = arith.constant 0 : index
    %c0_1 = arith.constant 0 : index
    %0 = vector.load %arg1[%c0, %c0_0, %c0_1] : memref<2x32x256xf32, #tpu.memory_space<vmem>>, vector<2x32x256xf32>
    %cst = arith.constant dense<0.000000e+00> : vector<2x32xf32>
    %1 = vector.multi_reduction <add>, %0, %cst [2] : vector<2x32x256xf32> to vector<2x32xf32>
    %cst_2 = arith.constant 2.560000e+02 : f32
    %2 = vector.broadcast %cst_2 : f32 to vector<2x32xf32>
    %3 = arith.divf %1, %2 : vector<2x32xf32>
    %c0_3 = arith.constant 0 : index
    %c0_4 = arith.constant 0 : index
    %4 = vector.load %arg2[%c0_3, %c0_4] : memref<32x2xf32, #tpu.memory_space<vmem>>, vector<32x2xf32>
    %cst_5 = arith.constant dense<0.000000e+00> : vector<2x2xf32>
    %5 = tpu.matmul %3, %4, %cst_5 {dimension_numbers = #tpu.dot_dimension_numbers<[1], [0], [0], [1], [0, 0, 1, 1], [], []>} : vector<2x32xf32>, vector<32x2xf32>, vector<2x2xf32> -> vector<2x2xf32>
    %cst_6 = arith.constant 0.000000e+00 : f32
    %6 = vector.broadcast %cst_6 : f32 to vector<2x2xf32>
    %7 = arith.maximumf %5, %6 : vector<2x2xf32>
    %c0_7 = arith.constant 0 : index
    %c0_8 = arith.constant 0 : index
    %8 = vector.load %arg3[%c0_7, %c0_8] : memref<2x32xf32, #tpu.memory_space<vmem>>, vector<2x32xf32>
    %cst_9 = arith.constant dense<0.000000e+00> : vector<2x32xf32>
    %9 = tpu.matmul %7, %8, %cst_9 {dimension_numbers = #tpu.dot_dimension_numbers<[1], [0], [0], [1], [0, 0, 1, 1], [], []>} : vector<2x2xf32>, vector<2x32xf32>, vector<2x32xf32> -> vector<2x32xf32>
    %10 = arith.negf %9 : vector<2x32xf32>
    %11 = math.exp %10 : vector<2x32xf32>
    %cst_10 = arith.constant 1.000000e+00 : f32
    %12 = vector.broadcast %cst_10 : f32 to vector<2x32xf32>
    %13 = arith.addf %12, %11 : vector<2x32xf32>
    %14 = arith.divf %12, %13 : vector<2x32xf32>
    %15 = vector.shape_cast %14 : vector<2x32xf32> to vector<2x32x1xf32>
    %16 = vector.broadcast %15 : vector<2x32x1xf32> to vector<2x32x256xf32>
    %17 = arith.mulf %0, %16 : vector<2x32x256xf32>
    %c0_11 = arith.constant 0 : index
    %c0_12 = arith.constant 0 : index
    %c0_13 = arith.constant 0 : index
    %18 = vector.load %arg4[%c0_11, %c0_12, %c0_13] : memref<2x32x256xf32, #tpu.memory_space<vmem>>, vector<2x32x256xf32>
    tpu.vector_store %arg4[%c0_11, %c0_12, %c0_13], %17 {strides = array<i32>} : memref<2x32x256xf32, #tpu.memory_space<vmem>>, vector<2x32x256xf32>,
    return
  }
  func.func @transform_0(%arg0: i32) -> (i32, i32, i32) {
    %c0_i32 = arith.constant 0 : i32
    %c0_i32_0 = arith.constant 0 : i32
    %c0_i32_1 = arith.constant 0 : i32
    return %arg0, %c0_i32, %c0_i32_0 : i32, i32, i32
  }
  func.func @transform_1(%arg0: i32) -> (i32, i32) {
    %c0_i32 = arith.constant 0 : i32
    %c0_i32_0 = arith.constant 0 : i32
    %c0_i32_1 = arith.constant 0 : i32
    return %c0_i32, %c0_i32_0 : i32, i32
  }
  func.func @transform_2(%arg0: i32) -> (i32, i32) {
    %c0_i32 = arith.constant 0 : i32
    %c0_i32_0 = arith.constant 0 : i32
    %c0_i32_1 = arith.constant 0 : i32
    return %c0_i32, %c0_i32_0 : i32, i32
  }
  func.func @transform_3(%arg0: i32) -> (i32, i32, i32) {
    %c0_i32 = arith.constant 0 : i32
    %c0_i32_0 = arith.constant 0 : i32
    %c0_i32_1 = arith.constant 0 : i32
    return %arg0, %c0_i32, %c0_i32_0 : i32, i32, i32
  }
}

</mosaic_0001>

<llo_original>
// kernel: tpu_custom_call.1
$region0: #{tpu_custom_call.1}
  #allocation0 [shape = 'u32[]', space=smem, size = 0x4, offset = 0x4, fixed_abs, tag = 'smem constant byte address 0x4 - core index']
  #allocation1 [shape = 'u32[72,128]{1,0:T(1,128)}', space=vmem, size = 0x9000, scoped, tag = 'internal scratch']
  %s0 = inlined_call_operand.hbm [shape: f32[2,32,256], index: 0, kind: input, shape index: {}]
  %s1 = inlined_call_operand.vmem [shape: f32[32,2], index: 1, kind: input, shape index: {}]
  %s2 = inlined_call_operand.vmem [shape: f32[2,32], index: 2, kind: input, shape index: {}]
  %s3 = inlined_call_operand.hbm [shape: f32[2,32,256], index: 3, kind: output, shape index: {}]
  %s4 = sld [smem:[#allocation0]]
  $region26: #{tpu_custom_call.1} parent=0
    _
  %s6 = ssub.s32 1, %s4
  %s7 = scalar_select 0, %s6, %s4
  $region1: #{tpu_custom_call.1} parent=0
    #allocation2 [shape = 'u8[65536]{0}', space=vmem, size = 0x10000, scoped, tag = 'input window, operand 0, single buffered']
    #allocation3 [shape = 's32[1]{0}', space=sflag, size = 0x4, scoped, tag = 'scoped memory for tpu_custom_call.1']
    #allocation4 [shape = 's32[1]{0}', space=sflag, size = 0x4, scoped, tag = 'scoped memory for tpu_custom_call.1']
    #allocation5 [shape = 'u8[65536]{0}', space=vmem, size = 0x10000, scoped, tag = 'output window, operand 0, single buffered']
    %8 = vsyncpa [#allocation3], 0
    %9 = vsyncpa [#allocation4], 0
    // Predicated region
    $region2: #{tpu_custom_call.1} parent=1 // pred_check
      _
    $region3: #{tpu_custom_call.1} parent=1 // pred_check_branch
      %11 = sbr.rel (0) target = $region5
    $region4: #{tpu_custom_call.1} parent=1 // pred_region
      %13 = vsyncadd [#allocation3], 0
      %s14 = sshll.u32 %s0, 4
      %s15 = int_to_ptr.hbm [resolvable:$true] %s14
      %s16 = sshll.u32 [#allocation2], 4
      %s17 = int_to_ptr.vmem [resolvable:$true] %s16
      %22 = dma.hbm_to_vmem [thread:$0]  %s15, 2048, %s17, [#allocation3], 256, 256, 16
    $region5: #{tpu_custom_call.1} parent=1 // pred_fallthru
      _
    // Predicated region
    $region6: #{tpu_custom_call.1} parent=1 // pred_check
      _
    $region7: #{tpu_custom_call.1} parent=1 // pred_check_branch
      %24 = sbr.rel (0) target = $region9
    $region8: #{tpu_custom_call.1} parent=1 // pred_region
      _
    $region9: #{tpu_custom_call.1} parent=1 // pred_fallthru
      _
    // Predicated region
    $region10: #{tpu_custom_call.1} parent=1 // pred_check
      _
    $region11: #{tpu_custom_call.1} parent=1 // pred_check_branch
      %26 = sbr.rel (0) target = $region13
    $region12: #{tpu_custom_call.1} parent=1 // pred_region
      _
    $region13: #{tpu_custom_call.1} parent=1 // pred_fallthru
      _
    // Predicated region
    $region14: #{tpu_custom_call.1} parent=1 // pred_check
      _
    $region15: #{tpu_custom_call.1} parent=1 // pred_check_branch
      %28 = sbr.rel (0) target = $region17
    $region16: #{tpu_custom_call.1} parent=1 // pred_region
      %30 = dma.done [#allocation3], 2048
    $region17: #{tpu_custom_call.1} parent=1 // pred_fallthru
      _
    %v31 = vld [vmem:[#allocation2] sm:$0xff]
    %v32 = vld [vmem:[#allocation2 + $0x8] sm:$0xff]
    %v33 = vld [vmem:[#allocation2 + $0x10] sm:$0xff]
    %v34 = vld [vmem:[#allocation2 + $0x18] sm:$0xff]
    %v35 = vld [vmem:[#allocation2 + $0x20] sm:$0xff]
    %v36 = vld [vmem:[#allocation2 + $0x28] sm:$0xff]
    %v37 = vld [vmem:[#allocation2 + $0x30] sm:$0xff]
    %v38 = vld [vmem:[#allocation2 + $0x38] sm:$0xff]
    %v39 = vld [vmem:[#allocation2 + $0x40] sm:$0xff]
    %v40 = vld [vmem:[#allocation2 + $0x48] sm:$0xff]
    %v41 = vld [vmem:[#allocation2 + $0x50] sm:$0xff]
    %v42 = vld [vmem:[#allocation2 + $0x58] sm:$0xff]
    %v43 = vld [vmem:[#allocation2 + $0x60] sm:$0xff]
    %v44 = vld [vmem:[#allocation2 + $0x68] sm:$0xff]
    %v45 = vld [vmem:[#allocation2 + $0x70] sm:$0xff]
    %v46 = vld [vmem:[#allocation2 + $0x78] sm:$0xff]
    %v47 = vadd.f32 %v31, %v32
    %48 = vadd.xlane.f32.xlu0 %v47
    %v49 = vpop.xlane.xlu0 %48
    %v50 = vadd.f32 %v33, %v34
    %51 = vadd.xlane.f32.xlu0 %v50
    %v52 = vpop.xlane.xlu0 %51
    %v53 = vadd.f32 %v35, %v36
    %54 = vadd.xlane.f32.xlu0 %v53
    %v55 = vpop.xlane.xlu0 %54
    %v56 = vadd.f32 %v37, %v38
    %57 = vadd.xlane.f32.xlu0 %v56
    %v58 = vpop.xlane.xlu0 %57
    %v59 = vadd.f32 %v39, %v40
    %60 = vadd.xlane.f32.xlu0 %v59
    %v61 = vpop.xlane.xlu0 %60
    %v62 = vadd.f32 %v41, %v42
    %63 = vadd.xlane.f32.xlu0 %v62
    %v64 = vpop.xlane.xlu0 %63
    %v65 = vadd.f32 %v43, %v44
    %66 = vadd.xlane.f32.xlu0 %v65
    %v67 = vpop.xlane.xlu0 %66
    %v68 = vadd.f32 %v45, %v46
    %69 = vadd.xlane.f32.xlu0 %v68
    %v70 = vpop.xlane.xlu0 %69
    %v71 = vrcp.pop 256.0
    %v72 = vmul.f32 256.0, %v71
    %v73 = vsub.f32 1.0, %v72
    %v74 = vmul.f32 %v71, %v73
    %v75 = vadd.f32 %v71, %v74
    %vm76 = vweird.f32 %v71
    %v77 = vsel %vm76, %v71, %v75
    %v78 = vmul.f32 %v49, %v77
    %v79 = vmul.f32 %v52, %v77
    %v80 = vmul.f32 %v55, %v77
    %v81 = vmul.f32 %v58, %v77
    %v82 = vmul.f32 %v61, %v77
    %v83 = vmul.f32 %v64, %v77
    %v84 = vmul.f32 %v67, %v77
    %v85 = vmul.f32 %v70, %v77
    %v86 = vld [vmem:[%s1] sm:$0xff]
    %v87 = vld [vmem:[%s1 + $0x8] sm:$0xff]
    %v88 = vld [vmem:[%s1 + $0x10] sm:$0xff]
    %v89 = vld [vmem:[%s1 + $0x18] sm:$0xff]
    %v98 = vlaneseq
    %v99 = vand.u32 %v98, 127
    %v100 = vperm.slane %v78, %v99
    %v101 = vadd.s32 %v99, 4294967288
    %v102 = vperm.slane %v79, %v101
    %vm103 = vcmask 130112
    %v104 = vsel %vm103, %v102, %v100
    %v105 = vadd.s32 %v99, 4294967280
    %v106 = vperm.slane %v80, %v105
    %vm107 = vcmask 195712
    %v108 = vsel %vm107, %v106, %v104
    %v109 = vadd.s32 %v99, 4294967272
    %v110 = vperm.slane %v81, %v109
    %vm111 = vcmask 261312
    %v112 = vsel %vm111, %v110, %v108
    %v113 = vperm.slane %v82, %v99
    %v114 = vperm.slane %v83, %v101
    %v115 = vsel %vm103, %v114, %v113
    %v116 = vperm.slane %v84, %v105
    %v117 = vsel %vm107, %v116, %v115
    %v118 = vperm.slane %v85, %v109
    %v119 = vsel %vm111, %v118, %v117
    %vm120 = vcmask 1041409
    %v121 = vsel %vm120, %v119, %v112
    %vm122 = vcmask 261120
    %v123 = vsel %vm122, %v121, 0
    %125 = vmatpush.msra.mxu0 0.0
    %126 = vmatpush.msra.mxu0 0.0
    %127 = vmatpush.msra.mxu0 0.0
    %128 = vmatpush.msra.mxu0 0.0
    %129 = vmatpush.msra.mxu0 0.0
    %130 = vmatpush.msra.mxu0 0.0
    %131 = vmatpush.msra.mxu0 0.0
    %132 = vmatpush.msra.mxu0 0.0
    %133 = vmatpush.msra.mxu0 0.0
    %134 = vmatpush.msra.mxu0 0.0
    %135 = vmatpush.msra.mxu0 0.0
    %136 = vmatpush.msra.mxu0 0.0
    %137 = vmatpush.msra.mxu0 %v89
    %138 = vmatpush.msra.mxu0 %v88
    %139 = vmatpush.msra.mxu0 %v87
    %140 = vmatpush.msra.mxu0 %v86
    %141 = vmatmul.f32.gmra.mxu0 %v123
    %v142 = vpop.f32.mrf.mxu0
    %v143 = vadd.f32 0.0, %v142
    %144 = vdwg.mxu0
    %v145 = vmax.f32 %v143, 0.0
    %v146 = vld [vmem:[%s2] sm:$0x3]
    %vm147 = vcmask 15360
    %v149 = vsel %vm147, %v145, 0
    %vm151 = vcmask 1041408
    %v153 = vsel %vm151, %v146, 0
    %155 = vmatpush.msra.mxu0 0.0
    %156 = vmatpush.msra.mxu0 0.0
    %157 = vmatpush.msra.mxu0 0.0
    %158 = vmatpush.msra.mxu0 0.0
    %159 = vmatpush.msra.mxu0 0.0
    %160 = vmatpush.msra.mxu0 0.0
    %161 = vmatpush.msra.mxu0 0.0
    %162 = vmatpush.msra.mxu0 0.0
    %163 = vmatpush.msra.mxu0 0.0
    %164 = vmatpush.msra.mxu0 0.0
    %165 = vmatpush.msra.mxu0 0.0
    %166 = vmatpush.msra.mxu0 0.0
    %167 = vmatpush.msra.mxu0 0.0
    %168 = vmatpush.msra.mxu0 0.0
    %169 = vmatpush.msra.mxu0 0.0
    %170 = vmatpush.msra.mxu0 %v153
    %171 = vmatmul.f32.gmra.mxu0 %v149
    %v172 = vpop.f32.mrf.mxu0
    %v173 = vadd.f32 0.0, %v172
    %174 = vdwg.mxu0
    %v175 = vxor.u32 %v173, 2147483648
    %v176 = vmul.f32 %v175, 1.442695
    %v177 = vpow.pop %v176
    %v178 = vadd.f32 %v177, 1.0
    %v179 = vrcp.pop %v178
    %v180 = vmul.f32 %v178, %v179
    %v181 = vsub.f32 1.0, %v180
    %v182 = vmul.f32 %v179, %v181
    %v183 = vadd.f32 %v179, %v182
    %vm184 = vweird.f32 %v178
    %vm185 = vweird.f32 %v179
    %vm186 = vmor %vm184, %vm185
    %v187 = vsel %vm186, %v179, %v183
    %v188 = vand.u32 2147483647, %v178
    %vm189 = vcmp.eq.f32.partialorder %v188, 8.507059e+37
    %v190 = vand.u32 %v178, 2147483648
    %v191 = vor.u32 1.1754944e-38, %v190
    %v192 = vsel %vm189, %v191, %v187
    %v193 = vmul.f32 1.0, %v192
    %v194 = vperm.slane %v193, 0
    %v195 = vlaneseq
    %v196 = vshrl.u32 %v195, 7
    %198 = vset.pattern.permute.xlu0 %v196
    %199 = vperm.xlu0 %198, %v194
    %v200 = vpop.permute.xlu0 %199
    %v201 = vlaneseq
    %v202 = vshrl.u32 %v201, 7
    %v203 = vadd.s32 %v202, 8
    %204 = vset.pattern.permute.xlu0 %v203
    %205 = vperm.xlu0 %204, %v194
    %v206 = vpop.permute.xlu0 %205
    %v207 = vlaneseq
    %v208 = vshrl.u32 %v207, 7
    %v209 = vadd.s32 %v208, 16
    %210 = vset.pattern.permute.xlu0 %v209
    %211 = vperm.xlu0 %210, %v194
    %v212 = vpop.permute.xlu0 %211
    %v213 = vlaneseq
    %v214 = vshrl.u32 %v213, 7
    %v215 = vadd.s32 %v214, 24
    %216 = vset.pattern.permute.xlu0 %v215
    %217 = vperm.xlu0 %216, %v194
    %v218 = vpop.permute.xlu0 %217
    %v219 = vperm.slane %v193, 1
    %v220 = vlaneseq
    %v221 = vshrl.u32 %v220, 7
    %223 = vset.pattern.permute.xlu0 %v221
    %224 = vperm.xlu0 %223, %v219
    %v225 = vpop.permute.xlu0 %224
    %v226 = vlaneseq
    %v227 = vshrl.u32 %v226, 7
    %v228 = vadd.s32 %v227, 8
    %229 = vset.pattern.permute.xlu0 %v228
    %230 = vperm.xlu0 %229, %v219
    %v231 = vpop.permute.xlu0 %230
    %v232 = vlaneseq
    %v233 = vshrl.u32 %v232, 7
    %v234 = vadd.s32 %v233, 16
    %235 = vset.pattern.permute.xlu0 %v234
    %236 = vperm.xlu0 %235, %v219
    %v237 = vpop.permute.xlu0 %236
    %v238 = vlaneseq
    %v239 = vshrl.u32 %v238, 7
    %v240 = vadd.s32 %v239, 24
    %241 = vset.pattern.permute.xlu0 %v240
    %242 = vperm.xlu0 %241, %v219
    %v243 = vpop.permute.xlu0 %242
    %v244 = vmul.f32 %v31, %v200
    %v245 = vmul.f32 %v32, %v200
    %v246 = vmul.f32 %v33, %v206
    %v247 = vmul.f32 %v34, %v206
    %v248 = vmul.f32 %v35, %v212
    %v249 = vmul.f32 %v36, %v212
    %v250 = vmul.f32 %v37, %v218
    %v251 = vmul.f32 %v38, %v218
    %v252 = vmul.f32 %v39, %v225
    %v253 = vmul.f32 %v40, %v225
    %v254 = vmul.f32 %v41, %v231
    %v255 = vmul.f32 %v42, %v231
    %v256 = vmul.f32 %v43, %v237
    %v257 = vmul.f32 %v44, %v237
    %v258 = vmul.f32 %v45, %v243
    %v259 = vmul.f32 %v46, %v243
    %260 = vst [vmem:[#allocation5] sm:$0xff] %v244
    %261 = vst [vmem:[#allocation5 + $0x8] sm:$0xff] %v245
    %262 = vst [vmem:[#allocation5 + $0x10] sm:$0xff] %v246
    %263 = vst [vmem:[#allocation5 + $0x18] sm:$0xff] %v247
    %264 = vst [vmem:[#allocation5 + $0x20] sm:$0xff] %v248
    %265 = vst [vmem:[#allocation5 + $0x28] sm:$0xff] %v249
    %266 = vst [vmem:[#allocation5 + $0x30] sm:$0xff] %v250
    %267 = vst [vmem:[#allocation5 + $0x38] sm:$0xff] %v251
    %268 = vst [vmem:[#allocation5 + $0x40] sm:$0xff] %v252
    %269 = vst [vmem:[#allocation5 + $0x48] sm:$0xff] %v253
    %270 = vst [vmem:[#allocation5 + $0x50] sm:$0xff] %v254
    %271 = vst [vmem:[#allocation5 + $0x58] sm:$0xff] %v255
    %272 = vst [vmem:[#allocation5 + $0x60] sm:$0xff] %v256
    %273 = vst [vmem:[#allocation5 + $0x68] sm:$0xff] %v257
    %274 = vst [vmem:[#allocation5 + $0x70] sm:$0xff] %v258
    %275 = vst [vmem:[#allocation5 + $0x78] sm:$0xff] %v259
    // Predicated region
    $region18: #{tpu_custom_call.1} parent=1 // pred_check
      _
    $region19: #{tpu_custom_call.1} parent=1 // pred_check_branch
      %277 = sbr.rel (0) target = $region21
    $region20: #{tpu_custom_call.1} parent=1 // pred_region
      %279 = vsyncadd [#allocation4], 0
      %s280 = sshll.u32 [#allocation5], 4
      %s281 = int_to_ptr.vmem [resolvable:$true] %s280
      %s282 = sshll.u32 %s3, 4
      %s283 = int_to_ptr.hbm [resolvable:$true] %s282
      %288 = dma.vmem_to_hbm [thread:$0]  %s281, 2048, %s283, [#allocation4], 256, 256, 16
    $region21: #{tpu_custom_call.1} parent=1 // pred_fallthru
      _
    // Predicated region
    $region22: #{tpu_custom_call.1} parent=1 // pred_check
      _
    $region23: #{tpu_custom_call.1} parent=1 // pred_check_branch
      %290 = sbr.rel (0) target = $region25
    $region24: #{tpu_custom_call.1} parent=1 // pred_region
      %292 = dma.done [#allocation4], 2048
    $region25: #{tpu_custom_call.1} parent=1 // pred_fallthru
      _
    %293 = vsyncpa [#allocation3], 1
    %294 = vsyncpa [#allocation4], 1

</llo_original>
